<compile_context>
chip_gen: v7x
topology: tpu7x:2x2x1
jax: 0.10.0
libtpu: 0.0.40
codegen_flags: <defaults>
</compile_context>

<pallas_src>
import functools

import numpy as np
import jax
import jax.numpy as jnp
from jax import lax
from jax.experimental import pallas as pl
from jax.experimental.pallas import tpu as pltpu


def hetconv_kernel(x_ref, w_ref, o_ref):
    # x_ref : (Nb, Hp, Wp*Cin)     padded activations, (w, c) packed on the lane axis
    # w_ref : (3, Wp*Cin, W*Cout)  block-Toeplitz weight, one slab per dy tap
    #                              (the 1x1 pointwise conv is folded into dy == 1)
    # o_ref : (Nb, H, W*Cout)      lane-dense output (W*Cout is a multiple of 128 here)
    nb, H, WC = o_ref.shape
    K = x_ref.shape[2]
    acc = jnp.zeros((nb * H, WC), jnp.float32)          # f32 accumulator, stays in vregs
    for dy in range(3):                                 # unrolled: 3 MXU matmuls per block
        # Per-image row window [dy, dy+H); flattening (Nb, H) -> Nb*H is legal because
        # each image has its own pad rows, and cheap because H is a multiple of 8.
        lhs = x_ref[:, dy:dy + H, :].reshape(nb * H, K)
        acc = acc + jnp.dot(lhs, w_ref[dy], preferred_element_type=jnp.float32)
    # Store the f32 accumulator directly (o_ref dtype == x dtype, normally f32).
    o_ref[...] = acc.reshape(nb, H, WC).astype(o_ref.dtype)


def pack_hetconv_weights(wg_torch, wp_torch, *, p, W, dtype=jnp.float32):
    """One-time weight packing (hoist out of the per-call hot path).

    wg_torch: (Cout, Cin//p, 3, 3) grouped-conv weight (PyTorch OIHW layout).
    wp_torch: (Cout, Cin, 1, 1)    pointwise-conv weight.
    Returns w_toep: (3, (W+2)*Cin, W*Cout) block-Toeplitz weight in `dtype`.
    """
    Cout, cig = wg_torch.shape[0], wg_torch.shape[1]
    Cin = wp_torch.shape[1]
    assert Cin % p == 0 and Cout % p == 0, "in/out channels must be divisible by p"
    assert cig == Cin // p
    cog = Cout // p
    Wp = W + 2

    # Dense per-tap weight (3, 3, Cin, Cout): block-diagonal == groups=p conv.
    wg_dense = jnp.zeros((3, 3, Cin, Cout), jnp.float32)
    for g in range(p):
        blk = jnp.transpose(wg_torch[g * cog:(g + 1) * cog].astype(jnp.float32),
                            (2, 3, 1, 0))                       # (3, 3, cig, cog)
        wg_dense = wg_dense.at[:, :, g * cig:(g + 1) * cig,
                               g * cog:(g + 1) * cog].set(blk)
    # Fold the 1x1 pointwise conv into the centre tap (identical math).
    wp_mat = jnp.transpose(wp_torch[:, :, 0, 0].astype(jnp.float32), (1, 0))  # (Cin, Cout)
    wg_dense = wg_dense.at[1, 1].add(wp_mat)

    # Block-Toeplitz over the width axis:
    #   w_toep[dy, wi*Cin + ci, w*Cout + c] = wg_dense[dy, wi - w, ci, c]  if 0 <= wi-w < 3 else 0
    dx = np.arange(Wp)[:, None] - np.arange(W)[None, :]          # (Wp, W), static
    valid = jnp.asarray((dx >= 0) & (dx < 3), jnp.float32)
    gathered = wg_dense[:, np.clip(dx, 0, 2)]                    # (3, Wp, W, Cin, Cout)
    gathered = gathered * valid[None, :, :, None, None]
    w_toep = jnp.transpose(gathered, (0, 1, 3, 2, 4)).reshape(3, Wp * Cin, W * Cout)
    return w_toep.astype(dtype)


def _pick_nb(N, H, target_m=256):
    """Images per grid step: aim for M = Nb*H >= 128/256, keep >= 2 grid steps when N allows."""
    nb_cap = max(1, target_m // max(H, 1))
    if N >= 2 * nb_cap:
        return nb_cap                       # full-size blocks, still >= 2 steps (megacore)
    if N >= 2:
        return max(1, N // 2)               # split across both TensorCores on v7x
    return max(N, 1)


def hetconv_apply(x_nchw, w_toep, *, nb=None, nchw_out=True):
    """HetConv forward.  x_nchw: (N, Cin, H, W).  w_toep: from pack_hetconv_weights.

    Compute dtype follows w_toep.dtype (bf16 recommended on v5e/v6e/v7x); the MXU
    accumulates in f32 and the kernel stores the f32 accumulator (output dtype = x dtype).
    Set nchw_out=False to skip the trailing NCHW transpose (returns (N, H, W, Cout)).
    """
    N, Cin, H, W = x_nchw.shape
    Hp, Wp = H + 2, W + 2
    assert w_toep.shape[0] == 3 and w_toep.shape[1] == Wp * Cin, "w_toep does not match x"
    Cout = w_toep.shape[2] // W
    assert w_toep.shape[2] == W * Cout
    cdtype = w_toep.dtype
    odtype = x_nchw.dtype
    # Perf notes (correctness holds for any shape because blocks span the full last
    # two dims): W*Cout % 128 == 0 gives unmasked lane-dense stores; H % 8 == 0 keeps
    # the (Nb, H) -> Nb*H flatten a free sublane collapse.
    if nb is None:
        nb = _pick_nb(N, H)
    if H % 8 != 0:
        nb = 1                                            # avoid unaligned sublane collapse

    n_pad = -N % nb
    Npad = N + n_pad

    # ---------- activation packing: NCHW -> padded NHWC with (W, Cin) merged on lanes ----------
    x = jnp.transpose(x_nchw, (0, 2, 3, 1)).astype(cdtype)        # (N, H, W, Cin)
    xp = jnp.pad(x, ((0, n_pad), (1, 1), (1, 1), (0, 0))).reshape(Npad, Hp, Wp * Cin)

    # ---------- hot path: Pallas kernel, Nb batch images per grid step ----------
    out = pl.pallas_call(
        hetconv_kernel,
        out_shape=jax.ShapeDtypeStruct((Npad, H, W * Cout), odtype),
        grid=(Npad // nb,),
        in_specs=[
            pl.BlockSpec((nb, Hp, Wp * Cin), lambda n: (n, 0, 0)),
            pl.BlockSpec((3, Wp * Cin, W * Cout), lambda n: (0, 0, 0)),  # resident weight
        ],
        out_specs=pl.BlockSpec((nb, H, W * Cout), lambda n: (n, 0, 0)),
        compiler_params=pltpu.CompilerParams(
            dimension_semantics=("parallel",),            # shards grid across v7x TensorCores
            vmem_limit_bytes=64 * 1024 * 1024,            # headroom for larger tiles (v5e default 16 MiB)
        ),
    )(xp, w_toep)

    out = out[:N].reshape(N, H, W, Cout)
    if nchw_out:
        out = jnp.transpose(out, (0, 3, 1, 2))            # extra HBM pass; skip if consumer is NHWC
    return out


def hetconv_reference(x_nchw, wg_torch, wp_torch, p):
    """Pure-JAX reference matching the PyTorch forward exactly (NCHW)."""
    gwc = lax.conv_general_dilated(
        x_nchw, wg_torch, window_strides=(1, 1), padding=((1, 1), (1, 1)),
        dimension_numbers=("NCHW", "OIHW", "NCHW"), feature_group_count=p)
    pwc = lax.conv_general_dilated(
        x_nchw, wp_torch, window_strides=(1, 1), padding=((0, 0), (0, 0)),
        dimension_numbers=("NCHW", "OIHW", "NCHW"))
    return gwc + pwc


if __name__ == "__main__":
    # HetConv(in_channels=4, out_channels=8, p=2); input x: (2, 4, 16, 16) NCHW
    N, Cin, Cout, p, H, W = 2, 4, 8, 2, 16, 16

    key = jax.random.PRNGKey(0)
    kx, kg, kp = jax.random.split(key, 3)
    x = jax.random.normal(kx, (N, Cin, H, W), dtype=jnp.float32)
    wg = jax.random.normal(kg, (Cout, Cin // p, 3, 3), dtype=jnp.float32) * 0.2
    wp = jax.random.normal(kp, (Cout, Cin, 1, 1), dtype=jnp.float32) * 0.3

    # Weight packing hoisted out of the hot path (weights are static at inference).
    w_f32 = jax.block_until_ready(pack_hetconv_weights(wg, wp, p=p, W=W, dtype=jnp.float32))
    w_bf16 = jax.block_until_ready(pack_hetconv_weights(wg, wp, p=p, W=W, dtype=jnp.bfloat16))

    run_nchw = jax.jit(hetconv_apply)                                     # NCHW out (PyTorch layout)
    run_nhwc = jax.jit(functools.partial(hetconv_apply, nchw_out=False))  # skip trailing transpose

    ref = jax.block_until_ready(hetconv_reference(x, wg, wp, p))

    # f32 compute path
    out_f32 = jax.block_until_ready(run_nchw(x, w_f32))
    np.testing.assert_allclose(np.asarray(out_f32), np.asarray(ref), rtol=1e-4, atol=1e-4)

    # bf16 compute / f32 accumulate + f32 store (recommended on v5e/v6e/v7x)
    out_bf16 = jax.block_until_ready(run_nchw(x, w_bf16))
    np.testing.assert_allclose(np.asarray(out_bf16), np.asarray(ref), rtol=5e-2, atol=5e-2)

    # NHWC output path (no trailing NCHW transpose)
    out_nhwc = jax.block_until_ready(run_nhwc(x, w_f32))
    np.testing.assert_allclose(np.asarray(out_nhwc),
                               np.asarray(jnp.transpose(ref, (0, 2, 3, 1))),
                               rtol=1e-4, atol=1e-4)

    print("KERNEL_OK")
</pallas_src>

<mosaic_0001>
module attributes {stable_mosaic.version = 11 : i64} {
  func.func @hetconv_kernel(%arg0: i32, %arg1: memref<1x18x72xf32, #tpu.memory_space<vmem>>, %arg2: memref<3x72x128xf32, #tpu.memory_space<vmem>>, %arg3: memref<1x16x128xf32, #tpu.memory_space<vmem>>) attributes {dimension_semantics = [#tpu.dimension_semantics<parallel>], iteration_bounds = array<i64: 2>, scalar_prefetch = 0 : i64, scratch_operands = 0 : i64, tpu.core_type = #tpu.core_type<tc>, window_params = [{transform_indices = @transform_0, window_bounds = array<i64: 1, 18, 72>}, {pipeline_mode = #tpu.pipeline_mode<synchronous>, transform_indices = @transform_1, window_bounds = array<i64: 3, 72, 128>}, {transform_indices = @transform_2, window_bounds = array<i64: 1, 16, 128>}]} {
    %cst = arith.constant 0.000000e+00 : f32
    %0 = vector.broadcast %cst : f32 to vector<16x128xf32>
    %c0 = arith.constant 0 : index
    %c0_0 = arith.constant 0 : index
    %c0_1 = arith.constant 0 : index
    %1 = vector.load %arg1[%c0, %c0_0, %c0_1] : memref<1x18x72xf32, #tpu.memory_space<vmem>>, vector<1x16x72xf32>
    %2 = vector.shape_cast %1 : vector<1x16x72xf32> to vector<16x72xf32>
    %c0_2 = arith.constant 0 : index
    %c0_3 = arith.constant 0 : index
    %c0_4 = arith.constant 0 : index
    %3 = vector.load %arg2[%c0_2, %c0_3, %c0_4] : memref<3x72x128xf32, #tpu.memory_space<vmem>>, vector<1x72x128xf32>
    %4 = vector.shape_cast %3 : vector<1x72x128xf32> to vector<72x128xf32>
    %cst_5 = arith.constant dense<0.000000e+00> : vector<16x128xf32>
    %5 = tpu.matmul %2, %4, %cst_5 {dimension_numbers = #tpu.dot_dimension_numbers<[1], [0], [0], [1], [0, 0, 1, 1], [], []>} : vector<16x72xf32>, vector<72x128xf32>, vector<16x128xf32> -> vector<16x128xf32>
    %6 = arith.addf %0, %5 : vector<16x128xf32>
    %c0_6 = arith.constant 0 : index
    %c1 = arith.constant 1 : index
    %c0_7 = arith.constant 0 : index
    %7 = vector.load %arg1[%c0_6, %c1, %c0_7] : memref<1x18x72xf32, #tpu.memory_space<vmem>>, vector<1x16x72xf32>
    %8 = vector.shape_cast %7 : vector<1x16x72xf32> to vector<16x72xf32>
    %c1_8 = arith.constant 1 : index
    %c0_9 = arith.constant 0 : index
    %c0_10 = arith.constant 0 : index
    %9 = vector.load %arg2[%c1_8, %c0_9, %c0_10] : memref<3x72x128xf32, #tpu.memory_space<vmem>>, vector<1x72x128xf32>
    %10 = vector.shape_cast %9 : vector<1x72x128xf32> to vector<72x128xf32>
    %cst_11 = arith.constant dense<0.000000e+00> : vector<16x128xf32>
    %11 = tpu.matmul %8, %10, %cst_11 {dimension_numbers = #tpu.dot_dimension_numbers<[1], [0], [0], [1], [0, 0, 1, 1], [], []>} : vector<16x72xf32>, vector<72x128xf32>, vector<16x128xf32> -> vector<16x128xf32>
    %12 = arith.addf %6, %11 : vector<16x128xf32>
    %c0_12 = arith.constant 0 : index
    %c2 = arith.constant 2 : index
    %c0_13 = arith.constant 0 : index
    %13 = vector.load %arg1[%c0_12, %c2, %c0_13] : memref<1x18x72xf32, #tpu.memory_space<vmem>>, vector<1x16x72xf32>
    %14 = vector.shape_cast %13 : vector<1x16x72xf32> to vector<16x72xf32>
    %c2_14 = arith.constant 2 : index
    %c0_15 = arith.constant 0 : index
    %c0_16 = arith.constant 0 : index
    %15 = vector.load %arg2[%c2_14, %c0_15, %c0_16] : memref<3x72x128xf32, #tpu.memory_space<vmem>>, vector<1x72x128xf32>
    %16 = vector.shape_cast %15 : vector<1x72x128xf32> to vector<72x128xf32>
    %cst_17 = arith.constant dense<0.000000e+00> : vector<16x128xf32>
    %17 = tpu.matmul %14, %16, %cst_17 {dimension_numbers = #tpu.dot_dimension_numbers<[1], [0], [0], [1], [0, 0, 1, 1], [], []>} : vector<16x72xf32>, vector<72x128xf32>, vector<16x128xf32> -> vector<16x128xf32>
    %18 = arith.addf %12, %17 : vector<16x128xf32>
    %19 = vector.shape_cast %18 : vector<16x128xf32> to vector<1x16x128xf32>
    %c0_18 = arith.constant 0 : index
    %c0_19 = arith.constant 0 : index
    %c0_20 = arith.constant 0 : index
    %20 = vector.load %arg3[%c0_18, %c0_19, %c0_20] : memref<1x16x128xf32, #tpu.memory_space<vmem>>, vector<1x16x128xf32>
    tpu.vector_store %arg3[%c0_18, %c0_19, %c0_20], %19 {strides = array<i32>} : memref<1x16x128xf32, #tpu.memory_space<vmem>>, vector<1x16x128xf32>,
    return
  }
  func.func @transform_0(%arg0: i32) -> (i32, i32, i32) {
    %c0_i32 = arith.constant 0 : i32
    %c0_i32_0 = arith.constant 0 : i32
    %c0_i32_1 = arith.constant 0 : i32
    return %arg0, %c0_i32, %c0_i32_0 : i32, i32, i32
  }
  func.func @transform_1(%arg0: i32) -> (i32, i32, i32) {
    %c0_i32 = arith.constant 0 : i32
    %c0_i32_0 = arith.constant 0 : i32
    %c0_i32_1 = arith.constant 0 : i32
    %c0_i32_2 = arith.constant 0 : i32
    return %c0_i32, %c0_i32_0, %c0_i32_1 : i32, i32, i32
  }
  func.func @transform_2(%arg0: i32) -> (i32, i32, i32) {
    %c0_i32 = arith.constant 0 : i32
    %c0_i32_0 = arith.constant 0 : i32
    %c0_i32_1 = arith.constant 0 : i32
    return %arg0, %c0_i32, %c0_i32_0 : i32, i32, i32
  }
}

</mosaic_0001>

<llo_original>
// kernel: hetconv_apply.1
$region0: #{hetconv_apply.1}
  #allocation0 [shape = 'u32[]', space=smem, size = 0x4, offset = 0x4, fixed_abs, tag = 'smem constant byte address 0x4 - core index']
  #allocation1 [shape = 'u32[144,128]{1,0:T(1,128)}', space=vmem, size = 0x12000, scoped, tag = 'internal scratch']
  %s0 = inlined_call_operand.hbm [shape: f32[2,18,72], index: 0, kind: input, shape index: {}]
  %s1 = inlined_call_operand.hbm [shape: f32[3,72,128], index: 1, kind: input, shape index: {}]
  %s2 = inlined_call_operand.hbm [shape: f32[2,16,128], index: 2, kind: output, shape index: {}]
  %s3 = sld [smem:[#allocation0]]
  $region49: #{hetconv_apply.1} parent=0
    _
  %s5 = ssub.s32 1, %s3
  %s6 = scalar_select 0, %s5, %s3
  $region1: #{hetconv_apply.1} parent=0
    #allocation2 [shape = 'u8[24576]{0}', space=vmem, size = 0x6000, scoped, tag = 'input window, operand 0']
    #allocation3 [shape = 's32[2]{0}', space=sflag, size = 0x8, scoped, tag = 'scoped memory for hetconv_apply.1']
    #allocation4 [shape = 's32[2]{0}', space=sflag, size = 0x8, scoped, tag = 'scoped memory for hetconv_apply.1']
    #allocation5 [shape = 'u8[110592]{0}', space=vmem, size = 0x1b000, scoped, tag = 'input window, operand 1, single buffered']
    #allocation6 [shape = 's32[1]{0}', space=sflag, size = 0x4, scoped, tag = 'scoped memory for hetconv_apply.1']
    #allocation7 [shape = 'u8[16384]{0}', space=vmem, size = 0x4000, scoped, tag = 'output window, operand 0']
    %7 = vsyncpa [#allocation3], 0
    %s8 = scalar_lea.sflag [#allocation3], 1
    %9 = vsyncpa %s8, 0
    %10 = vsyncpa [#allocation6], 0
    %11 = vsyncpa [#allocation4], 0
    %s12 = scalar_lea.sflag [#allocation4], 1
    %13 = vsyncpa %s12, 0
    loop: start=0, step=1, limit=4
    $region2: #{hetconv_apply.1} parent=1 // loop_pre_header
      _
    $region3: #{hetconv_apply.1} parent=1 // loop_header
      %s15 = sphi 0, %s19
      %p16 = scmp.ge.s32.totalorder %s15, 4
      %s25 = sphi 0, %s27
      %s28 = sphi 0, %s25
      %s29 = sphi 0, %s28
      %s45 = sphi 0, %s29
      %s49 = sphi 0, %s49
      %s51 = sphi 0, %s49
      %s52 = sphi 0, %s51
      %s66 = sphi 0, %s52
      %s72 = sphi 0, %s74
      %s75 = sphi 0, %s72
      %s76 = sphi 0, %s75
      %s92 = sphi 0, %s76
    $region4: #{hetconv_apply.1} parent=1 // loop_header_branch
      %18 = sbr.rel (%p16) target = $region8
    $region5: #{hetconv_apply.1} parent=1 // loop_body
      %s20 = ssub.s32 %s15, 1
      %s21 = ssub.s32 %s15, 2
      %s22 = sadd.s32 %s15, 1
      %s23 = ssub.s32 %s15, %s22
      %p24 = scmp.eq.s32.totalorder %s23, 0
      %s26 = sadd.s32 %s25, 1
      %s27 = scalar_select %p24, %s25, %s26
      %p30 = pneg %p24
      %p31 = scmp.eq.s32.totalorder %s15, 1
      %p32 = por %p30, %p31
      %p33 = scmp.ne.s32.totalorder %s25, %s28
      %p34 = scmp.eq.s32.totalorder %s15, 0
      %p35 = por %p33, %p34
      %p36 = scmp.ne.s32.totalorder %s25, %s28
      %p37 = scmp.eq.s32.totalorder %s20, 1
      %p38 = por %p36, %p37
      %p39 = scmp.ne.s32.totalorder %s28, %s29
      %p40 = scmp.eq.s32.totalorder %s20, 0
      %p41 = por %p39, %p40
      %p42 = scmp.ne.s32.totalorder %s28, %s29
      %p43 = scmp.eq.s32.totalorder %s21, 1
      %p44 = por %p42, %p43
      %p46 = scmp.ne.s32.totalorder %s29, %s45
      %p47 = scmp.eq.s32.totalorder %s21, 0
      %p48 = por %p46, %p47
      %s50 = sadd.s32 %s49, 1
      %p53 = scmp.eq.s32.totalorder %s15, 1
      %p54 = scmp.ne.s32.totalorder %s49, %s51
      %p55 = scmp.eq.s32.totalorder %s15, 0
      %p56 = por %p54, %p55
      %p57 = scmp.ne.s32.totalorder %s49, %s51
      %p58 = scmp.eq.s32.totalorder %s20, 1
      %p59 = por %p57, %p58
      %p60 = scmp.ne.s32.totalorder %s51, %s52
      %p61 = scmp.eq.s32.totalorder %s20, 0
      %p62 = por %p60, %p61
      %p63 = scmp.ne.s32.totalorder %s51, %s52
      %p64 = scmp.eq.s32.totalorder %s21, 1
      %p65 = por %p63, %p64
      %p67 = scmp.ne.s32.totalorder %s52, %s66
      %p68 = scmp.eq.s32.totalorder %s21, 0
      %p69 = por %p67, %p68
      %s70 = ssub.s32 %s15, %s22
      %p71 = scmp.eq.s32.totalorder %s70, 0
      %s73 = sadd.s32 %s72, 1
      %s74 = scalar_select %p71, %s72, %s73
      %p77 = pneg %p71
      %p78 = scmp.eq.s32.totalorder %s15, 1
      %p79 = por %p77, %p78
      %p80 = scmp.ne.s32.totalorder %s72, %s75
      %p81 = scmp.eq.s32.totalorder %s15, 0
      %p82 = por %p80, %p81
      %p83 = scmp.ne.s32.totalorder %s72, %s75
      %p84 = scmp.eq.s32.totalorder %s20, 1
      %p85 = por %p83, %p84
      %p86 = scmp.ne.s32.totalorder %s75, %s76
      %p87 = scmp.eq.s32.totalorder %s20, 0
      %p88 = por %p86, %p87
      %p89 = scmp.ne.s32.totalorder %s75, %s76
      %p90 = scmp.eq.s32.totalorder %s21, 1
      %p91 = por %p89, %p90
      %p93 = scmp.ne.s32.totalorder %s76, %s92
      %p94 = scmp.eq.s32.totalorder %s21, 0
      %p95 = por %p93, %p94
      %p96 = scmp.le.s32.totalorder 1, %s15
      %p97 = scmp.lt.s32.totalorder %s15, 3
      %p98 = pnand %p96, %p97
      %p99 = pneg %p98
      // Predicated region
      $region9: #{hetconv_apply.1} parent=5 // pred_check
        _
      $region10: #{hetconv_apply.1} parent=5 // pred_check_branch
        %101 = sbr.rel (%p98) target = $region12
      $region11: #{hetconv_apply.1} parent=5 // pred_region
        %s102 = ssub.s32 %s15, 1
        // Predicated region
        $region13: #{hetconv_apply.1} parent=11 // pred_check
          %p103 = pneg %p62
        $region14: #{hetconv_apply.1} parent=11 // pred_check_branch
          %105 = sbr.rel (%p103) target = $region16
        $region15: #{hetconv_apply.1} parent=11 // pred_region
          %s107 = ssub.s32 3456, 3456
          %108 = vsyncadd [#allocation6], %s107
          %s109 = sshll.u32 [#allocation5], 4
          %s110 = int_to_ptr.vmem [resolvable:$true] %s109
          %115 = dma.hbm_to_vmem [thread:$0]  %s1, 3456, %s110, [#allocation6], 128, 128, 8
        $region16: #{hetconv_apply.1} parent=11 // pred_fallthru
          _
      $region12: #{hetconv_apply.1} parent=5 // pred_fallthru
        _
      %p116 = scmp.lt.s32.totalorder %s15, 2
      // Predicated region
      $region17: #{hetconv_apply.1} parent=5 // pred_check
        %p117 = pneg %p116
      $region18: #{hetconv_apply.1} parent=5 // pred_check_branch
        %119 = sbr.rel (%p117) target = $region20
      $region19: #{hetconv_apply.1} parent=5 // pred_region
        // Predicated region
        $region21: #{hetconv_apply.1} parent=19 // pred_check
          %p120 = pneg %p35
        $region22: #{hetconv_apply.1} parent=19 // pred_check_branch
          %122 = sbr.rel (%p120) target = $region24
        $region23: #{hetconv_apply.1} parent=19 // pred_region
          %s123 = sand.u32 %s25, 1
          %s124 = scalar_lea.sflag [#allocation3], %s123
          %s125 = sand.u32 %s25, 1
          %s126 = smul.addr %s125, 24
          %s127 = scalar_lea.vmem [#allocation2], %s126
          %s129 = ssub.s32 384, 384
          %130 = vsyncadd %s124, %s129
          %s131 = smul.addr %s15, 3
          %s132 = smul.addr %s131, 128
          %s133 = scalar_lea.hbm %s0, %s132
          %s134 = sshll.u32 %s127, 4
          %s135 = int_to_ptr.vmem [resolvable:$true] %s134
          %140 = dma.hbm_to_vmem [thread:$0]  %s133, 384, %s135, %s124, 128, 128, 8
        $region24: #{hetconv_apply.1} parent=19 // pred_fallthru
          _
      $region20: #{hetconv_apply.1} parent=5 // pred_fallthru
        _
      %p141 = scmp.le.s32.totalorder 1, %s15
      %p142 = scmp.lt.s32.totalorder %s15, 3
      %p143 = pnand %p141, %p142
      %p144 = pneg %p143
      // Predicated region
      $region25: #{hetconv_apply.1} parent=5 // pred_check
        _
      $region26: #{hetconv_apply.1} parent=5 // pred_check_branch
        %146 = sbr.rel (%p143) target = $region28
      $region27: #{hetconv_apply.1} parent=5 // pred_region
        %s147 = ssub.s32 %s15, 1
        %s148 = sand.u32 %s28, 1
        %s149 = scalar_lea.sflag [#allocation3], %s148
        %s150 = sand.u32 %s28, 1
        %s151 = smul.addr %s150, 24
        %s152 = scalar_lea.vmem [#allocation2], %s151
        // Predicated region
        $region29: #{hetconv_apply.1} parent=27 // pred_check
          %p153 = pneg %p41
        $region30: #{hetconv_apply.1} parent=27 // pred_check_branch
          %155 = sbr.rel (%p153) target = $region32
        $region31: #{hetconv_apply.1} parent=27 // pred_region
          %156 = dma.done %s149, 384
        $region32: #{hetconv_apply.1} parent=27 // pred_fallthru
          _
        // Predicated region
        $region33: #{hetconv_apply.1} parent=27 // pred_check
          %p157 = pneg %p62
        $region34: #{hetconv_apply.1} parent=27 // pred_check_branch
          %159 = sbr.rel (%p157) target = $region36
        $region35: #{hetconv_apply.1} parent=27 // pred_region
          %160 = dma.done [#allocation6], 3456
        $region36: #{hetconv_apply.1} parent=27 // pred_fallthru
          _
        %s161 = sand.u32 %s28, 1
        %s162 = scalar_lea.sflag [#allocation3], %s161
        %s163 = sand.u32 %s28, 1
        %s164 = smul.addr %s163, 24
        %s165 = scalar_lea.vmem [#allocation2], %s164
        %p166 = pneg %p41
        %p167 = pneg %p38
        %p168 = pneg %p62
        %p169 = pneg %p59
        %p170 = pneg %p88
        %p171 = pneg %p85
        %s172 = sand.u32 %s75, 1
        %s173 = scalar_lea.sflag [#allocation4], %s172
        %s174 = sand.u32 %s75, 1
        %s175 = smul.addr %s174, 16
        %s176 = scalar_lea.vmem [#allocation7], %s175
        %v177 = vld [vmem:[%s152] sm:$0xff]
        %v178 = vld [vmem:[%s152 + $0x8] sm:$0xff]
        %v179 = vld [vmem:[#allocation5] sm:$0xff]
        %v180 = vld [vmem:[#allocation5 + $0x8] sm:$0xff]
        %v181 = vld [vmem:[#allocation5 + $0x10] sm:$0xff]
        %v182 = vld [vmem:[#allocation5 + $0x18] sm:$0xff]
        %v183 = vld [vmem:[#allocation5 + $0x20] sm:$0xff]
        %v184 = vld [vmem:[#allocation5 + $0x28] sm:$0xff]
        %v185 = vld [vmem:[#allocation5 + $0x30] sm:$0xff]
        %v186 = vld [vmem:[#allocation5 + $0x38] sm:$0xff]
        %v187 = vld [vmem:[#allocation5 + $0x40] sm:$0xff]
        %v188 = vld [vmem:[%s152 + $0x1] sm:$0xff]
        %v189 = vld [vmem:[%s152 + $0x9] sm:$0xff]
        %s190 = scalar_lea.vmem [#allocation5], 72
        %v191 = vld [vmem:[%s190] sm:$0xff]
        %v192 = vld [vmem:[%s190 + $0x8] sm:$0xff]
        %v193 = vld [vmem:[%s190 + $0x10] sm:$0xff]
        %v194 = vld [vmem:[%s190 + $0x18] sm:$0xff]
        %v195 = vld [vmem:[%s190 + $0x20] sm:$0xff]
        %v196 = vld [vmem:[%s190 + $0x28] sm:$0xff]
        %v197 = vld [vmem:[%s190 + $0x30] sm:$0xff]
        %v198 = vld [vmem:[%s190 + $0x38] sm:$0xff]
        %v199 = vld [vmem:[%s190 + $0x40] sm:$0xff]
        %vm200 = vcmask 588800
        %v202 = vsel %vm200, %v188, 0
        %v205 = vsel %vm200, %v189, 0
        %207 = vmatprep.subr.mxu0 0.0
        %208 = vmatpush1.msra.mxu0 %v191
        %209 = vmatprep.subr.mxu0 0.0
        %210 = vmatpush1.msra.mxu0 %v192
        %211 = vmatprep.subr.mxu0 0.0
        %212 = vmatpush1.msra.mxu0 %v193
        %213 = vmatprep.subr.mxu0 0.0
        %214 = vmatpush1.msra.mxu0 %v194
        %215 = vmatprep.subr.mxu0 0.0
        %216 = vmatpush1.msra.mxu0 %v195
        %217 = vmatprep.subr.mxu0 0.0
        %218 = vmatpush1.msra.mxu0 %v196
        %219 = vmatprep.subr.mxu0 0.0
        %220 = vmatpush1.msra.mxu0 %v197
        %221 = vmatprep.subr.mxu0 0.0
        %222 = vmatpush1.msra.mxu0 %v198
        %223 = vmatprep.subr.mxu0 0.0
        %224 = vmatpush1.msra.mxu0 %v199
        %225 = vmatprep.subr.mxu0 0.0
        %226 = vmatpush1.msra.mxu0 0.0
        %227 = vmatprep.subr.mxu0 0.0
        %228 = vmatpush1.msra.mxu0 0.0
        %229 = vmatprep.subr.mxu0 0.0
        %230 = vmatpush1.msra.mxu0 0.0
        %231 = vmatprep.subr.mxu0 0.0
        %232 = vmatpush1.msra.mxu0 0.0
        %233 = vmatprep.subr.mxu0 0.0
        %234 = vmatpush1.msra.mxu0 0.0
        %235 = vmatprep.subr.mxu0 0.0
        %236 = vmatpush1.msra.mxu0 0.0
        %237 = vmatprep.subr.mxu0 0.0
        %238 = vmatpush1.msra.mxu0 0.0
        %239 = vmatprep.subr.mxu0 0.0
        %240 = vmatpush1.msra.mxu0 0.0
        %241 = vmatprep.subr.mxu0 0.0
        %242 = vmatpush1.msra.mxu0 0.0
        %243 = vmatprep.subr.mxu0 0.0
        %244 = vmatpush1.msra.mxu0 0.0
        %245 = vmatprep.subr.mxu0 0.0
        %246 = vmatpush1.msra.mxu0 0.0
        %247 = vmatprep.subr.mxu0 0.0
        %248 = vmatpush1.msra.mxu0 0.0
        %249 = vmatprep.subr.mxu0 0.0
        %250 = vmatpush1.msra.mxu0 0.0
        %251 = vmatprep.subr.mxu0 0.0
        %252 = vmatpush1.msra.mxu0 0.0
        %253 = vmatprep.subr.mxu0 0.0
        %254 = vmatpush1.msra.mxu0 0.0
        %255 = vmatprep.subr.mxu0 0.0
        %256 = vmatpush1.msra.mxu0 0.0
        %257 = vmatprep.subr.mxu0 0.0
        %258 = vmatpush1.msra.mxu0 0.0
        %259 = vmatprep.subr.mxu0 0.0
        %260 = vmatpush1.msra.mxu0 0.0
        %261 = vmatprep.subr.mxu0 0.0
        %262 = vmatpush1.msra.mxu0 0.0
        %263 = vmatprep.subr.mxu0 0.0
        %264 = vmatpush1.msra.mxu0 0.0
        %265 = vmatprep.subr.mxu0 0.0
        %266 = vmatpush1.msra.mxu0 0.0
        %267 = vmatprep.subr.mxu0 0.0
        %268 = vmatpush1.msra.mxu0 0.0
        %269 = vmatprep.subr.mxu0 0.0
        %270 = vmatpush1.msra.mxu0 0.0
        %271 = vmatprep.mubr.f32.mxu0 0.0
        %272 = vmatmul.mubr.f32.gmra.mrb[0].mxu0 %v202
        %v273 = vpop.f32.mrb[0].mxu0
        %v274 = vadd.f32 0.0, %v273
        %v275 = vpop.f32.mrb[0].mxu0
        %276 = vmatprep.mubr.f32.mxu0 0.0
        %277 = vmatmul.mubr.f32.gmra.mrb[0].mxu0 %v205
        %v278 = vpop.f32.mrb[0].mxu0
        %v279 = vadd.f32 0.0, %v278
        %v280 = vpop.f32.mrb[0].mxu0
        %281 = vdwg.mxu0
        %v283 = vsel %vm200, %v177, 0
        %v286 = vsel %vm200, %v178, 0
        %288 = vmatprep.subr.mxu0 0.0
        %289 = vmatpush1.msra.mxu0 %v179
        %290 = vmatprep.subr.mxu0 0.0
        %291 = vmatpush1.msra.mxu0 %v180
        %292 = vmatprep.subr.mxu0 0.0
        %293 = vmatpush1.msra.mxu0 %v181
        %294 = vmatprep.subr.mxu0 0.0
        %295 = vmatpush1.msra.mxu0 %v182
        %296 = vmatprep.subr.mxu0 0.0
        %297 = vmatpush1.msra.mxu0 %v183
        %298 = vmatprep.subr.mxu0 0.0
        %299 = vmatpush1.msra.mxu0 %v184
        %300 = vmatprep.subr.mxu0 0.0
        %301 = vmatpush1.msra.mxu0 %v185
        %302 = vmatprep.subr.mxu0 0.0
        %303 = vmatpush1.msra.mxu0 %v186
        %304 = vmatprep.subr.mxu0 0.0
        %305 = vmatpush1.msra.mxu0 %v187
        %306 = vmatprep.subr.mxu0 0.0
        %307 = vmatpush1.msra.mxu0 0.0
        %308 = vmatprep.subr.mxu0 0.0
        %309 = vmatpush1.msra.mxu0 0.0
        %310 = vmatprep.subr.mxu0 0.0
        %311 = vmatpush1.msra.mxu0 0.0
        %312 = vmatprep.subr.mxu0 0.0
        %313 = vmatpush1.msra.mxu0 0.0
        %314 = vmatprep.subr.mxu0 0.0
        %315 = vmatpush1.msra.mxu0 0.0
        %316 = vmatprep.subr.mxu0 0.0
        %317 = vmatpush1.msra.mxu0 0.0
        %318 = vmatprep.subr.mxu0 0.0
        %319 = vmatpush1.msra.mxu0 0.0
        %320 = vmatprep.subr.mxu0 0.0
        %321 = vmatpush1.msra.mxu0 0.0
        %322 = vmatprep.subr.mxu0 0.0
        %323 = vmatpush1.msra.mxu0 0.0
        %324 = vmatprep.subr.mxu0 0.0
        %325 = vmatpush1.msra.mxu0 0.0
        %326 = vmatprep.subr.mxu0 0.0
        %327 = vmatpush1.msra.mxu0 0.0
        %328 = vmatprep.subr.mxu0 0.0
        %329 = vmatpush1.msra.mxu0 0.0
        %330 = vmatprep.subr.mxu0 0.0
        %331 = vmatpush1.msra.mxu0 0.0
        %332 = vmatprep.subr.mxu0 0.0
        %333 = vmatpush1.msra.mxu0 0.0
        %334 = vmatprep.subr.mxu0 0.0
        %335 = vmatpush1.msra.mxu0 0.0
        %336 = vmatprep.subr.mxu0 0.0
        %337 = vmatpush1.msra.mxu0 0.0
        %338 = vmatprep.subr.mxu0 0.0
        %339 = vmatpush1.msra.mxu0 0.0
        %340 = vmatprep.subr.mxu0 0.0
        %341 = vmatpush1.msra.mxu0 0.0
        %342 = vmatprep.subr.mxu0 0.0
        %343 = vmatpush1.msra.mxu0 0.0
        %344 = vmatprep.subr.mxu0 0.0
        %345 = vmatpush1.msra.mxu0 0.0
        %346 = vmatprep.subr.mxu0 0.0
        %347 = vmatpush1.msra.mxu0 0.0
        %348 = vmatprep.subr.mxu0 0.0
        %349 = vmatpush1.msra.mxu0 0.0
        %350 = vmatprep.subr.mxu0 0.0
        %351 = vmatpush1.msra.mxu0 0.0
        %352 = vmatprep.mubr.f32.mxu0 0.0
        %353 = vmatmul.mubr.f32.gmra.mrb[0].mxu0 %v283
        %v354 = vpop.f32.mrb[0].mxu0
        %v355 = vadd.f32 %v274, %v354
        %v356 = vpop.f32.mrb[0].mxu0
        %357 = vmatprep.mubr.f32.mxu0 0.0
        %358 = vmatmul.mubr.f32.gmra.mrb[0].mxu0 %v286
        %v359 = vpop.f32.mrb[0].mxu0
        %v360 = vadd.f32 %v279, %v359
        %v361 = vpop.f32.mrb[0].mxu0
        %362 = vdwg.mxu0
        %v363 = vld [vmem:[%s152 + $0x2] sm:$0xff]
        %v364 = vld [vmem:[%s152 + $0xa] sm:$0xff]
        %s365 = scalar_lea.vmem [#allocation5], 144
        %v366 = vld [vmem:[%s365] sm:$0xff]
        %v367 = vld [vmem:[%s365 + $0x8] sm:$0xff]
        %v368 = vld [vmem:[%s365 + $0x10] sm:$0xff]
        %v369 = vld [vmem:[%s365 + $0x18] sm:$0xff]
        %v370 = vld [vmem:[%s365 + $0x20] sm:$0xff]
        %v371 = vld [vmem:[%s365 + $0x28] sm:$0xff]
        %v372 = vld [vmem:[%s365 + $0x30] sm:$0xff]
        %v373 = vld [vmem:[%s365 + $0x38] sm:$0xff]
        %v374 = vld [vmem:[%s365 + $0x40] sm:$0xff]
        %v376 = vsel %vm200, %v363, 0
        %v379 = vsel %vm200, %v364, 0
        %381 = vmatprep.subr.mxu0 0.0
        %382 = vmatpush1.msra.mxu0 %v366
        %383 = vmatprep.subr.mxu0 0.0
        %384 = vmatpush1.msra.mxu0 %v367
        %385 = vmatprep.subr.mxu0 0.0
        %386 = vmatpush1.msra.mxu0 %v368
        %387 = vmatprep.subr.mxu0 0.0
        %388 = vmatpush1.msra.mxu0 %v369
        %389 = vmatprep.subr.mxu0 0.0
        %390 = vmatpush1.msra.mxu0 %v370
        %391 = vmatprep.subr.mxu0 0.0
        %392 = vmatpush1.msra.mxu0 %v371
        %393 = vmatprep.subr.mxu0 0.0
        %394 = vmatpush1.msra.mxu0 %v372
        %395 = vmatprep.subr.mxu0 0.0
        %396 = vmatpush1.msra.mxu0 %v373
        %397 = vmatprep.subr.mxu0 0.0
        %398 = vmatpush1.msra.mxu0 %v374
        %399 = vmatprep.subr.mxu0 0.0
        %400 = vmatpush1.msra.mxu0 0.0
        %401 = vmatprep.subr.mxu0 0.0
        %402 = vmatpush1.msra.mxu0 0.0
        %403 = vmatprep.subr.mxu0 0.0
        %404 = vmatpush1.msra.mxu0 0.0
        %405 = vmatprep.subr.mxu0 0.0
        %406 = vmatpush1.msra.mxu0 0.0
        %407 = vmatprep.subr.mxu0 0.0
        %408 = vmatpush1.msra.mxu0 0.0
        %409 = vmatprep.subr.mxu0 0.0
        %410 = vmatpush1.msra.mxu0 0.0
        %411 = vmatprep.subr.mxu0 0.0
        %412 = vmatpush1.msra.mxu0 0.0
        %413 = vmatprep.subr.mxu0 0.0
        %414 = vmatpush1.msra.mxu0 0.0
        %415 = vmatprep.subr.mxu0 0.0
        %416 = vmatpush1.msra.mxu0 0.0
        %417 = vmatprep.subr.mxu0 0.0
        %418 = vmatpush1.msra.mxu0 0.0
        %419 = vmatprep.subr.mxu0 0.0
        %420 = vmatpush1.msra.mxu0 0.0
        %421 = vmatprep.subr.mxu0 0.0
        %422 = vmatpush1.msra.mxu0 0.0
        %423 = vmatprep.subr.mxu0 0.0
        %424 = vmatpush1.msra.mxu0 0.0
        %425 = vmatprep.subr.mxu0 0.0
        %426 = vmatpush1.msra.mxu0 0.0
        %427 = vmatprep.subr.mxu0 0.0
        %428 = vmatpush1.msra.mxu0 0.0
        %429 = vmatprep.subr.mxu0 0.0
        %430 = vmatpush1.msra.mxu0 0.0
        %431 = vmatprep.subr.mxu0 0.0
        %432 = vmatpush1.msra.mxu0 0.0
        %433 = vmatprep.subr.mxu0 0.0
        %434 = vmatpush1.msra.mxu0 0.0
        %435 = vmatprep.subr.mxu0 0.0
        %436 = vmatpush1.msra.mxu0 0.0
        %437 = vmatprep.subr.mxu0 0.0
        %438 = vmatpush1.msra.mxu0 0.0
        %439 = vmatprep.subr.mxu0 0.0
        %440 = vmatpush1.msra.mxu0 0.0
        %441 = vmatprep.subr.mxu0 0.0
        %442 = vmatpush1.msra.mxu0 0.0
        %443 = vmatprep.subr.mxu0 0.0
        %444 = vmatpush1.msra.mxu0 0.0
        %445 = vmatprep.mubr.f32.mxu0 0.0
        %446 = vmatmul.mubr.f32.gmra.mrb[0].mxu0 %v376
        %v447 = vpop.f32.mrb[0].mxu0
        %v448 = vadd.f32 0.0, %v447
        %v449 = vpop.f32.mrb[0].mxu0
        %450 = vmatprep.mubr.f32.mxu0 0.0
        %451 = vmatmul.mubr.f32.gmra.mrb[0].mxu0 %v379
        %v452 = vpop.f32.mrb[0].mxu0
        %v453 = vadd.f32 0.0, %v452
        %v454 = vpop.f32.mrb[0].mxu0
        %455 = vdwg.mxu0
        %v456 = vadd.f32 %v355, %v448
        %v457 = vadd.f32 %v360, %v453
        %458 = vst [vmem:[%s176] sm:$0xff] %v456
        %459 = vst [vmem:[%s176 + $0x8] sm:$0xff] %v457
        %s460 = sand.u32 %s75, 1
        %s461 = scalar_lea.sflag [#allocation4], %s460
        %s462 = sand.u32 %s75, 1
        %s463 = smul.addr %s462, 16
        %s464 = scalar_lea.vmem [#allocation7], %s463
        // Predicated region
        $region37: #{hetconv_apply.1} parent=27 // pred_check
          %p465 = pneg %p85
        $region38: #{hetconv_apply.1} parent=27 // pred_check_branch
          %467 = sbr.rel (%p465) target = $region40
        $region39: #{hetconv_apply.1} parent=27 // pred_region
          %s469 = ssub.s32 256, 256
          %470 = vsyncadd %s461, %s469
          %s471 = smul.addr %s20, 2
          %s472 = smul.addr %s471, 128
          %s473 = scalar_lea.hbm %s2, %s472
          %s474 = sshll.u32 %s464, 4
          %s475 = int_to_ptr.vmem [resolvable:$true] %s474
          %480 = dma.vmem_to_hbm [thread:$0]  %s475, 256, %s473, %s461, 128, 128, 8
        $region40: #{hetconv_apply.1} parent=27 // pred_fallthru
          _
      $region28: #{hetconv_apply.1} parent=5 // pred_fallthru
        _
      %p481 = scmp.le.s32.totalorder 2, %s15
      // Predicated region
      $region41: #{hetconv_apply.1} parent=5 // pred_check
        %p482 = pneg %p481
      $region42: #{hetconv_apply.1} parent=5 // pred_check_branch
        %484 = sbr.rel (%p482) target = $region44
      $region43: #{hetconv_apply.1} parent=5 // pred_region
        %s485 = ssub.s32 %s15, 2
        // Predicated region
        $region45: #{hetconv_apply.1} parent=43 // pred_check
          %p486 = pneg %p91
        $region46: #{hetconv_apply.1} parent=43 // pred_check_branch
          %488 = sbr.rel (%p486) target = $region48
        $region47: #{hetconv_apply.1} parent=43 // pred_region
          %s489 = sand.u32 %s76, 1
          %s490 = scalar_lea.sflag [#allocation4], %s489
          %s491 = sand.u32 %s76, 1
          %s492 = smul.addr %s491, 16
          %s493 = scalar_lea.vmem [#allocation7], %s492
          %494 = dma.done %s490, 256
        $region48: #{hetconv_apply.1} parent=43 // pred_fallthru
          _
      $region44: #{hetconv_apply.1} parent=5 // pred_fallthru
        _
    $region6: #{hetconv_apply.1} parent=1 // loop_footer
      %s19 = sadd.s32 1, %s15
    $region7: #{hetconv_apply.1} parent=1 // loop_footer_branch
      %14 = sbr.rel target = $region3
    $region8: #{hetconv_apply.1} parent=1 // loop_exit
      _
    %495 = vsyncpa [#allocation3], 1
    %s496 = scalar_lea.sflag [#allocation3], 1
    %497 = vsyncpa %s496, 1
    %498 = vsyncpa [#allocation6], 1
    %499 = vsyncpa [#allocation4], 1
    %s500 = scalar_lea.sflag [#allocation4], 1
    %501 = vsyncpa %s500, 1

</llo_original>
